<compile_context>
chip_gen: v7x
topology: tpu7x:2x2x1
jax: 0.10.0
libtpu: 0.0.40
codegen_flags: <defaults>
</compile_context>

<pallas_src>
import functools

import jax
import jax.numpy as jnp
from jax.experimental import pallas as pl
from jax.experimental.pallas import tpu as pltpu


_LANE = 128


def _round_up(x, m):
    return ((x + m - 1) // m) * m


def _vmem_budget():
    """(streaming tile budget, vmem_limit_bytes) derived from the actual chip."""
    try:
        cap = getattr(pltpu.get_tpu_info(), "vmem_capacity_bytes", None)
    except Exception:
        cap = None
    if not cap:
        cap = 64 * 1024 * 1024                       # conservative (v7x-sized) default
    budget = max(8 * 1024 * 1024, cap // 8)          # 8 MiB on v7x, 16 MiB on v5e/v6e
    limit = int(cap * 3 // 4)                        # scoped VMEM limit we request
    return budget, limit


# ----------------------------------------------------------------------------
# Fused single-pass kernel: pool + excitation MLP + scale (1 read + 1 write).
# ----------------------------------------------------------------------------
def _se_fused_kernel(x_ref, w1p_ref, w2p_ref, o_ref, *, inv_hw):
    x = x_ref[0]                                                       # (C, HW)
    # Global average pool with f32 accumulation, kept as a column so C stays on
    # sublanes end-to-end (no lane<->sublane relayouts anywhere below).
    mean = jnp.sum(x.astype(jnp.float32), axis=-1, keepdims=True) * inv_hw   # (C, 1)
    mean_w = jnp.broadcast_to(mean, (mean.shape[0], _LANE))                  # (C, 128)
    # FC1 -> ReLU -> FC2 -> sigmoid. The hidden dim is zero-padded to 128 in the
    # wrapper so all matmul dims are MXU-friendly; the padded rows/cols are exact
    # zeros and do not perturb the result.
    h = jnp.maximum(
        jnp.dot(w1p_ref[...], mean_w, preferred_element_type=jnp.float32), 0.0)
    z = jnp.dot(w2p_ref[...], h, preferred_element_type=jnp.float32)        # (C, 128)
    gate = 1.0 / (1.0 + jnp.exp(-z[:, 0:1]))                                # (C, 1)
    o_ref[0] = x * gate.astype(x.dtype)


# ----------------------------------------------------------------------------
# Streaming two-pass fallback kernels.
# ----------------------------------------------------------------------------
def _se_pool_kernel(x_ref, acc_ref, *, hw, hw_blk):
    """Accumulate per-(batch, channel-block) spatial sums into a lane-dense
    (1, c_blk, 128) f32 resident block with unrolled 128-lane VPU adds (no
    per-tile cross-lane reduce); the final 128->1 reduce happens once in JAX."""
    t = pl.program_id(2)

    @pl.when(t == 0)
    def _init():
        acc_ref[...] = jnp.zeros_like(acc_ref)

    x = x_ref[...]                                          # (1, c_blk, hw_blk)
    ragged = (hw % hw_blk) != 0
    acc = acc_ref[...]
    for g in range(hw_blk // _LANE):
        sl = x[..., g * _LANE:(g + 1) * _LANE].astype(jnp.float32)
        if ragged:
            # Unpadded cdiv grid: the partial last tile's tail lanes hold garbage,
            # so mask lanes past the true spatial extent out of the sum.
            lane = jax.lax.broadcasted_iota(jnp.int32, sl.shape, dimension=2)
            sl = jnp.where(t * hw_blk + g * _LANE + lane < hw, sl, 0.0)
        acc = acc + sl
    acc_ref[...] = acc


def _se_scale_kernel(x_ref, gate_ref, o_ref):
    # One multiply per element in the input dtype.  Tail lanes of a ragged last
    # tile compute garbage but the partial output store is masked by Pallas.
    o_ref[...] = x_ref[...] * gate_ref[...]


def _pick_tiles(C, HW, itemsize, budget):
    """Pick (c_blk, hw_blk) for the streaming path: hw_blk lane-dense (multiple of
    128, 512-2048 target) decoupled from 'must divide HW' (cdiv grid + masking);
    the channel dim is blocked (sublane multiples) before hw_blk is shrunk so
    big-C layers keep lane-dense spatial tiles."""
    sub = {1: 32, 2: 16}.get(itemsize, 8)          # sublane tile for the dtype

    def need(cb, hb):
        # scale pass (heaviest): double-buffered input + output tiles, plus the
        # pool pass's resident f32 accumulator block.
        return 4 * cb * hb * itemsize + 2 * cb * _LANE * 4

    hw_blk = min(_round_up(HW, _LANE), 2048)
    c_blk = C
    while need(c_blk, hw_blk) > budget and c_blk > sub:
        c_blk = max(sub, _round_up(c_blk // 2, sub))
    while need(c_blk, hw_blk) > budget and hw_blk > _LANE:
        hw_blk = max(_LANE, (hw_blk // 2 // _LANE) * _LANE)
    return c_blk, hw_blk


def se_forward(x, w1, w2, *, force_two_pass=False, c_block=None, hw_block=None):
    """SE forward pass.

    x : (B, C, H, W)  NCHW input
    w1: (C//r, C)     first nn.Linear weight (no bias)
    w2: (C, C//r)     second nn.Linear weight (no bias)
    Static kwargs are test/tuning knobs (force the streaming path / tile sizes;
    hw_block must be a multiple of 128, c_block a multiple of the sublane tile).
    """
    B, C, H, W = x.shape
    HW = H * W
    Ch = w1.shape[0]
    itemsize = jnp.dtype(x.dtype).itemsize
    inv_hw = 1.0 / float(HW)
    budget, vmem_limit = _vmem_budget()

    x_flat = x.reshape(B, C, HW)

    # ---------------- Fused single-pass path ---------------------------------
    Chp = _round_up(max(Ch, 1), _LANE)
    fused_bytes = (4 * C * HW * itemsize     # double-buffered input + output slabs
                   + 4 * C * HW              # f32 working set for the reduction
                   + 16 * C * Chp            # padded FC weights (with margin)
                   + 16 * C * _LANE)         # small f32 temporaries
    if not force_two_pass and fused_bytes <= vmem_limit // 2:
        w1p = jnp.zeros((Chp, C), jnp.float32).at[:Ch, :].set(w1.astype(jnp.float32))
        w2p = jnp.zeros((C, Chp), jnp.float32).at[:, :Ch].set(w2.astype(jnp.float32))
        out_flat = pl.pallas_call(
            functools.partial(_se_fused_kernel, inv_hw=inv_hw),
            out_shape=jax.ShapeDtypeStruct((B, C, HW), x.dtype),
            grid=(B,),
            in_specs=[pl.BlockSpec((1, C, HW), lambda b: (b, 0, 0)),
                      pl.BlockSpec((Chp, C), lambda b: (0, 0)),
                      pl.BlockSpec((C, Chp), lambda b: (0, 0))],
            out_specs=pl.BlockSpec((1, C, HW), lambda b: (b, 0, 0)),
            compiler_params=pltpu.CompilerParams(
                dimension_semantics=("parallel",),
                vmem_limit_bytes=vmem_limit),
        )(x_flat, w1p, w2p)
        return out_flat.reshape(B, C, H, W)

    # ---------------- Two-pass streaming fallback ----------------------------
    auto_c, auto_hw = (None, None)
    if c_block is None or hw_block is None:
        auto_c, auto_hw = _pick_tiles(C, HW, itemsize, budget)
    c_blk = c_block if c_block is not None else auto_c
    hw_blk = hw_block if hw_block is not None else auto_hw
    n_c = pl.cdiv(C, c_blk)
    n_hw = pl.cdiv(HW, hw_blk)

    # Pass 1: streamed global-sum pooling into a lane-dense f32 accumulator.
    pooled = pl.pallas_call(
        functools.partial(_se_pool_kernel, hw=HW, hw_blk=hw_blk),
        out_shape=jax.ShapeDtypeStruct((B, C, _LANE), jnp.float32),
        grid=(B, n_c, n_hw),
        in_specs=[pl.BlockSpec((1, c_blk, hw_blk), lambda b, c, t: (b, c, t),
                               pipeline_mode=pl.Buffered(3))],
        out_specs=pl.BlockSpec((1, c_blk, _LANE), lambda b, c, t: (b, c, 0)),
        compiler_params=pltpu.CompilerParams(
            dimension_semantics=("parallel", "parallel", "arbitrary"),
            vmem_limit_bytes=vmem_limit),
    )(x_flat)
    # TODO(synk): for B == 1 on v7x, additionally split the spatial reduction
    # across the two TensorCores (partial sums combined here) so both cores
    # stream HBM during the pool pass.

    # Excitation MLP (tiny (B, C) work, hoisted out of the streaming loops).
    y = jnp.sum(pooled, axis=-1) * inv_hw                     # true mean over HW
    h = jnp.maximum(jnp.dot(y, w1.T.astype(jnp.float32),
                            preferred_element_type=jnp.float32), 0.0)
    gate = jax.nn.sigmoid(jnp.dot(h, w2.T.astype(jnp.float32),
                                  preferred_element_type=jnp.float32))
    gate = gate.astype(x.dtype).reshape(B, C, 1)

    # Pass 2: streamed channel-wise rescale (unpadded; ragged tail stores masked).
    out_flat = pl.pallas_call(
        _se_scale_kernel,
        out_shape=jax.ShapeDtypeStruct((B, C, HW), x.dtype),
        grid=(B, n_c, n_hw),
        in_specs=[pl.BlockSpec((1, c_blk, hw_blk), lambda b, c, t: (b, c, t)),
                  pl.BlockSpec((1, c_blk, 1), lambda b, c, t: (b, c, 0))],
        out_specs=pl.BlockSpec((1, c_blk, hw_blk), lambda b, c, t: (b, c, t)),
        compiler_params=pltpu.CompilerParams(
            dimension_semantics=("parallel", "parallel", "parallel"),
            vmem_limit_bytes=vmem_limit),
    )(x_flat, gate)
    return out_flat.reshape(B, C, H, W)


def se_reference(x, w1, w2):
    """Pure-JAX reference matching the PyTorch module."""
    y = jnp.mean(x.astype(jnp.float32), axis=(2, 3))          # AdaptiveAvgPool2d(1)
    h = jnp.maximum(jnp.dot(y, w1.T.astype(jnp.float32)), 0.0)
    s = jax.nn.sigmoid(jnp.dot(h, w2.T.astype(jnp.float32)))
    return (x * s[:, :, None, None].astype(x.dtype)).astype(x.dtype)


if __name__ == "__main__":
    # Shapes consistent with the module (in_channel >= reduction so the
    # bottleneck is nonempty).
    B, C, H, W = 2, 32, 16, 16
    reduction = 16
    Ch = C // reduction  # hidden = 2

    key = jax.random.PRNGKey(0)
    kx, k1, k2 = jax.random.split(key, 3)

    # bf16-representable f32 values: makes the default-precision MXU matmuls in
    # the fused kernel numerically equivalent to the f32 reference MLP.
    def bf16ify(a):
        return a.astype(jnp.bfloat16).astype(jnp.float32)

    x = bf16ify(jax.random.normal(kx, (B, C, H, W), dtype=jnp.float32))
    w1 = bf16ify(jax.random.normal(k1, (Ch, C), dtype=jnp.float32) / jnp.sqrt(C))
    w2 = bf16ify(jax.random.normal(k2, (C, Ch), dtype=jnp.float32) / jnp.sqrt(Ch))

    se = jax.jit(se_forward, static_argnames=("force_two_pass", "c_block", "hw_block"))

    # 1) Fused single-pass path (pool + MLP + scale in one kernel).
    out = jax.block_until_ready(se(x, w1, w2))
    ref = se_reference(x, w1, w2)
    assert out.shape == (B, C, H, W)
    assert jnp.allclose(out, ref, atol=1e-4, rtol=1e-4), "fused path mismatch"

    # 2) Two-pass streaming fallback with a ragged (non-multiple-of-128) spatial
    #    extent and small forced tiles to exercise channel blocking, multi-tile
    #    accumulation and last-tile lane masking.
    Hr = Wr = 20  # HW = 400 -> 4 spatial tiles of 128, ragged tail of 16 lanes
    xr = bf16ify(jax.random.normal(kx, (B, C, Hr, Wr), dtype=jnp.float32))
    out2 = jax.block_until_ready(
        se(xr, w1, w2, force_two_pass=True, c_block=16, hw_block=128))
    ref2 = se_reference(xr, w1, w2)
    assert out2.shape == (B, C, Hr, Wr)
    assert jnp.allclose(out2, ref2, atol=1e-4, rtol=1e-4), "two-pass path mismatch"

    print("KERNEL_OK")
</pallas_src>

<mosaic_0001>
module attributes {stable_mosaic.version = 11 : i64} {
  func.func @_se_fused_kernel(%arg0: i32, %arg1: memref<1x32x256xf32, #tpu.memory_space<vmem>>, %arg2: memref<128x32xf32, #tpu.memory_space<vmem>>, %arg3: memref<32x128xf32, #tpu.memory_space<vmem>>, %arg4: memref<1x32x256xf32, #tpu.memory_space<vmem>>) attributes {dimension_semantics = [#tpu.dimension_semantics<parallel>], iteration_bounds = array<i64: 2>, scalar_prefetch = 0 : i64, scratch_operands = 0 : i64, tpu.core_type = #tpu.core_type<tc>, window_params = [{transform_indices = @transform_0, window_bounds = array<i64: 1, 32, 256>}, {pipeline_mode = #tpu.pipeline_mode<synchronous>, transform_indices = @transform_1, window_bounds = array<i64: 128, 32>}, {pipeline_mode = #tpu.pipeline_mode<synchronous>, transform_indices = @transform_2, window_bounds = array<i64: 32, 128>}, {transform_indices = @transform_3, window_bounds = array<i64: 1, 32, 256>}]} {
    %c0 = arith.constant 0 : index
    %c0_0 = arith.constant 0 : index
    %c0_1 = arith.constant 0 : index
    %0 = vector.load %arg1[%c0, %c0_0, %c0_1] : memref<1x32x256xf32, #tpu.memory_space<vmem>>, vector<1x32x256xf32>
    %1 = vector.shape_cast %0 : vector<1x32x256xf32> to vector<32x256xf32>
    %cst = arith.constant dense<0.000000e+00> : vector<32xf32>
    %2 = vector.multi_reduction <add>, %1, %cst [1] : vector<32x256xf32> to vector<32xf32>
    %3 = vector.shape_cast %2 : vector<32xf32> to vector<32x1xf32>
    %cst_2 = arith.constant 3.906250e-03 : f32
    %4 = vector.broadcast %cst_2 : f32 to vector<32x1xf32>
    %5 = arith.mulf %3, %4 : vector<32x1xf32>
    %6 = vector.shape_cast %5 : vector<32x1xf32> to vector<32x1xf32>
    %7 = vector.broadcast %6 : vector<32x1xf32> to vector<32x128xf32>
    %c0_3 = arith.constant 0 : index
    %c0_4 = arith.constant 0 : index
    %8 = vector.load %arg2[%c0_3, %c0_4] : memref<128x32xf32, #tpu.memory_space<vmem>>, vector<128x32xf32>
    %cst_5 = arith.constant dense<0.000000e+00> : vector<128x128xf32>
    %9 = tpu.matmul %8, %7, %cst_5 {dimension_numbers = #tpu.dot_dimension_numbers<[1], [0], [0], [1], [0, 0, 1, 1], [], []>} : vector<128x32xf32>, vector<32x128xf32>, vector<128x128xf32> -> vector<128x128xf32>
    %cst_6 = arith.constant 0.000000e+00 : f32
    %10 = vector.broadcast %cst_6 : f32 to vector<128x128xf32>
    %11 = arith.maximumf %9, %10 : vector<128x128xf32>
    %c0_7 = arith.constant 0 : index
    %c0_8 = arith.constant 0 : index
    %12 = vector.load %arg3[%c0_7, %c0_8] : memref<32x128xf32, #tpu.memory_space<vmem>>, vector<32x128xf32>
    %cst_9 = arith.constant dense<0.000000e+00> : vector<32x128xf32>
    %13 = tpu.matmul %12, %11, %cst_9 {dimension_numbers = #tpu.dot_dimension_numbers<[1], [0], [0], [1], [0, 0, 1, 1], [], []>} : vector<32x128xf32>, vector<128x128xf32>, vector<32x128xf32> -> vector<32x128xf32>
    %14 = vector.extract_strided_slice %13 {offsets = [0, 0], sizes = [32, 1], strides = [1, 1]} : vector<32x128xf32> to vector<32x1xf32>
    %cst_10 = arith.constant 0.000000e+00 : f32
    %15 = vector.broadcast %cst_10 : f32 to vector<32x1xf32>
    %16 = arith.subf %15, %14 : vector<32x1xf32>
    %17 = math.exp %16 : vector<32x1xf32>
    %cst_11 = arith.constant 1.000000e+00 : f32
    %18 = vector.broadcast %cst_11 : f32 to vector<32x1xf32>
    %19 = arith.addf %18, %17 : vector<32x1xf32>
    %cst_12 = arith.constant 1.000000e+00 : f32
    %20 = vector.broadcast %cst_12 : f32 to vector<32x1xf32>
    %21 = arith.divf %20, %19 : vector<32x1xf32>
    %22 = vector.broadcast %21 : vector<32x1xf32> to vector<32x256xf32>
    %23 = arith.mulf %1, %22 : vector<32x256xf32>
    %c0_13 = arith.constant 0 : index
    %c0_14 = arith.constant 0 : index
    %c0_15 = arith.constant 0 : index
    %24 = vector.load %arg4[%c0_13, %c0_14, %c0_15] : memref<1x32x256xf32, #tpu.memory_space<vmem>>, vector<1x32x256xf32>
    %25 = vector.shape_cast %24 : vector<1x32x256xf32> to vector<32x256xf32>
    %26 = vector.shape_cast %23 : vector<32x256xf32> to vector<1x32x256xf32>
    tpu.vector_store %arg4[%c0_13, %c0_14, %c0_15], %26 {strides = array<i32>} : memref<1x32x256xf32, #tpu.memory_space<vmem>>, vector<1x32x256xf32>,
    return
  }
  func.func @transform_0(%arg0: i32) -> (i32, i32, i32) {
    %c0_i32 = arith.constant 0 : i32
    %c0_i32_0 = arith.constant 0 : i32
    %c0_i32_1 = arith.constant 0 : i32
    return %arg0, %c0_i32, %c0_i32_0 : i32, i32, i32
  }
  func.func @transform_1(%arg0: i32) -> (i32, i32) {
    %c0_i32 = arith.constant 0 : i32
    %c0_i32_0 = arith.constant 0 : i32
    %c0_i32_1 = arith.constant 0 : i32
    return %c0_i32, %c0_i32_0 : i32, i32
  }
  func.func @transform_2(%arg0: i32) -> (i32, i32) {
    %c0_i32 = arith.constant 0 : i32
    %c0_i32_0 = arith.constant 0 : i32
    %c0_i32_1 = arith.constant 0 : i32
    return %c0_i32, %c0_i32_0 : i32, i32
  }
  func.func @transform_3(%arg0: i32) -> (i32, i32, i32) {
    %c0_i32 = arith.constant 0 : i32
    %c0_i32_0 = arith.constant 0 : i32
    %c0_i32_1 = arith.constant 0 : i32
    return %arg0, %c0_i32, %c0_i32_0 : i32, i32, i32
  }
}

</mosaic_0001>

<llo_original>
// kernel: se_forward.1
$region0: #{se_forward.1}
  #allocation0 [shape = 'u32[]', space=smem, size = 0x4, offset = 0x4, fixed_abs, tag = 'smem constant byte address 0x4 - core index']
  #allocation1 [shape = 'u32[144,128]{1,0:T(1,128)}', space=vmem, size = 0x12000, scoped, tag = 'internal scratch']
  %s0 = inlined_call_operand.vmem [shape: f32[2,32,256], index: 0, kind: input, shape index: {}]
  %s1 = inlined_call_operand.vmem [shape: f32[128,32], index: 1, kind: input, shape index: {}]
  %s2 = inlined_call_operand.vmem [shape: f32[32,128], index: 2, kind: input, shape index: {}]
  %s3 = inlined_call_operand.vmem [shape: f32[2,32,256], index: 3, kind: output, shape index: {}]
  %s4 = sld [smem:[#allocation0]]
  $region45: #{se_forward.1} parent=0
    _
  %s6 = ssub.s32 1, %s4
  %s7 = scalar_select 0, %s6, %s4
  loop: start=0, step=1, limit=4
  $region2: #{se_forward.1} parent=0 // loop_pre_header
    _
  $region3: #{se_forward.1} parent=0 // loop_header
    %s9 = sphi 0, %s13
    %p10 = scmp.ge.s32.totalorder %s9, 4
    %s19 = sphi 0, %s21
    %s22 = sphi 0, %s19
    %s23 = sphi 0, %s22
    %s39 = sphi 0, %s23
    %s43 = sphi 0, %s43
    %s45 = sphi 0, %s43
    %s46 = sphi 0, %s45
    %s60 = sphi 0, %s46
    %s64 = sphi 0, %s64
    %s66 = sphi 0, %s64
    %s67 = sphi 0, %s66
    %s81 = sphi 0, %s67
    %s87 = sphi 0, %s89
    %s90 = sphi 0, %s87
    %s91 = sphi 0, %s90
    %s107 = sphi 0, %s91
  $region4: #{se_forward.1} parent=0 // loop_header_branch
    %12 = sbr.rel (%p10) target = $region8
  $region5: #{se_forward.1} parent=0 // loop_body
    %s14 = ssub.s32 %s9, 1
    %s15 = ssub.s32 %s9, 2
    %s16 = sadd.s32 %s9, 1
    %s17 = ssub.s32 %s9, %s16
    %p18 = scmp.eq.s32.totalorder %s17, 0
    %s20 = sadd.s32 %s19, 1
    %s21 = scalar_select %p18, %s19, %s20
    %p24 = pneg %p18
    %p25 = scmp.eq.s32.totalorder %s9, 1
    %p26 = por %p24, %p25
    %p27 = scmp.ne.s32.totalorder %s19, %s22
    %p28 = scmp.eq.s32.totalorder %s9, 0
    %p29 = por %p27, %p28
    %p30 = scmp.ne.s32.totalorder %s19, %s22
    %p31 = scmp.eq.s32.totalorder %s14, 1
    %p32 = por %p30, %p31
    %p33 = scmp.ne.s32.totalorder %s22, %s23
    %p34 = scmp.eq.s32.totalorder %s14, 0
    %p35 = por %p33, %p34
    %p36 = scmp.ne.s32.totalorder %s22, %s23
    %p37 = scmp.eq.s32.totalorder %s15, 1
    %p38 = por %p36, %p37
    %p40 = scmp.ne.s32.totalorder %s23, %s39
    %p41 = scmp.eq.s32.totalorder %s15, 0
    %p42 = por %p40, %p41
    %s44 = sadd.s32 %s43, 1
    %p47 = scmp.eq.s32.totalorder %s9, 1
    %p48 = scmp.ne.s32.totalorder %s43, %s45
    %p49 = scmp.eq.s32.totalorder %s9, 0
    %p50 = por %p48, %p49
    %p51 = scmp.ne.s32.totalorder %s43, %s45
    %p52 = scmp.eq.s32.totalorder %s14, 1
    %p53 = por %p51, %p52
    %p54 = scmp.ne.s32.totalorder %s45, %s46
    %p55 = scmp.eq.s32.totalorder %s14, 0
    %p56 = por %p54, %p55
    %p57 = scmp.ne.s32.totalorder %s45, %s46
    %p58 = scmp.eq.s32.totalorder %s15, 1
    %p59 = por %p57, %p58
    %p61 = scmp.ne.s32.totalorder %s46, %s60
    %p62 = scmp.eq.s32.totalorder %s15, 0
    %p63 = por %p61, %p62
    %s65 = sadd.s32 %s64, 1
    %p68 = scmp.eq.s32.totalorder %s9, 1
    %p69 = scmp.ne.s32.totalorder %s64, %s66
    %p70 = scmp.eq.s32.totalorder %s9, 0
    %p71 = por %p69, %p70
    %p72 = scmp.ne.s32.totalorder %s64, %s66
    %p73 = scmp.eq.s32.totalorder %s14, 1
    %p74 = por %p72, %p73
    %p75 = scmp.ne.s32.totalorder %s66, %s67
    %p76 = scmp.eq.s32.totalorder %s14, 0
    %p77 = por %p75, %p76
    %p78 = scmp.ne.s32.totalorder %s66, %s67
    %p79 = scmp.eq.s32.totalorder %s15, 1
    %p80 = por %p78, %p79
    %p82 = scmp.ne.s32.totalorder %s67, %s81
    %p83 = scmp.eq.s32.totalorder %s15, 0
    %p84 = por %p82, %p83
    %s85 = ssub.s32 %s9, %s16
    %p86 = scmp.eq.s32.totalorder %s85, 0
    %s88 = sadd.s32 %s87, 1
    %s89 = scalar_select %p86, %s87, %s88
    %p92 = pneg %p86
    %p93 = scmp.eq.s32.totalorder %s9, 1
    %p94 = por %p92, %p93
    %p95 = scmp.ne.s32.totalorder %s87, %s90
    %p96 = scmp.eq.s32.totalorder %s9, 0
    %p97 = por %p95, %p96
    %p98 = scmp.ne.s32.totalorder %s87, %s90
    %p99 = scmp.eq.s32.totalorder %s14, 1
    %p100 = por %p98, %p99
    %p101 = scmp.ne.s32.totalorder %s90, %s91
    %p102 = scmp.eq.s32.totalorder %s14, 0
    %p103 = por %p101, %p102
    %p104 = scmp.ne.s32.totalorder %s90, %s91
    %p105 = scmp.eq.s32.totalorder %s15, 1
    %p106 = por %p104, %p105
    %p108 = scmp.ne.s32.totalorder %s91, %s107
    %p109 = scmp.eq.s32.totalorder %s15, 0
    %p110 = por %p108, %p109
    %p111 = scmp.le.s32.totalorder 1, %s9
    %p112 = scmp.lt.s32.totalorder %s9, 3
    %p113 = pnand %p111, %p112
    %p114 = pneg %p113
    // Predicated region
    $region9: #{se_forward.1} parent=5 // pred_check
      _
    $region10: #{se_forward.1} parent=5 // pred_check_branch
      %116 = sbr.rel (%p113) target = $region12
    $region11: #{se_forward.1} parent=5 // pred_region
      %s117 = ssub.s32 %s9, 1
      // Predicated region
      $region13: #{se_forward.1} parent=11 // pred_check
        %p118 = pneg %p56
      $region14: #{se_forward.1} parent=11 // pred_check_branch
        %120 = sbr.rel (%p118) target = $region16
      $region15: #{se_forward.1} parent=11 // pred_region
        _
      $region16: #{se_forward.1} parent=11 // pred_fallthru
        _
      // Predicated region
      $region17: #{se_forward.1} parent=11 // pred_check
        %p121 = pneg %p77
      $region18: #{se_forward.1} parent=11 // pred_check_branch
        %123 = sbr.rel (%p121) target = $region20
      $region19: #{se_forward.1} parent=11 // pred_region
        _
      $region20: #{se_forward.1} parent=11 // pred_fallthru
        _
    $region12: #{se_forward.1} parent=5 // pred_fallthru
      _
    %p124 = scmp.lt.s32.totalorder %s9, 2
    // Predicated region
    $region21: #{se_forward.1} parent=5 // pred_check
      %p125 = pneg %p124
    $region22: #{se_forward.1} parent=5 // pred_check_branch
      %127 = sbr.rel (%p125) target = $region24
    $region23: #{se_forward.1} parent=5 // pred_region
      // Predicated region
      $region25: #{se_forward.1} parent=23 // pred_check
        %p128 = pneg %p29
      $region26: #{se_forward.1} parent=23 // pred_check_branch
        %130 = sbr.rel (%p128) target = $region28
      $region27: #{se_forward.1} parent=23 // pred_region
        %p131 = scmp.lt.s32.totalorder %s9, 1
        %s132 = scalar_select %p131, %s9, 1
        %s133 = smul.addr %s132, 8
        %s134 = smul.addr %s133, 8
        %s135 = scalar_lea.vmem %s0, %s134
      $region28: #{se_forward.1} parent=23 // pred_fallthru
        _
    $region24: #{se_forward.1} parent=5 // pred_fallthru
      _
    %p136 = scmp.le.s32.totalorder 1, %s9
    %p137 = scmp.lt.s32.totalorder %s9, 3
    %p138 = pnand %p136, %p137
    %p139 = pneg %p138
    // Predicated region
    $region29: #{se_forward.1} parent=5 // pred_check
      _
    $region30: #{se_forward.1} parent=5 // pred_check_branch
      %141 = sbr.rel (%p138) target = $region32
    $region31: #{se_forward.1} parent=5 // pred_region
      %s142 = ssub.s32 %s9, 1
      %p143 = scmp.lt.s32.totalorder %s14, 1
      %s144 = scalar_select %p143, %s14, 1
      %s145 = smul.addr %s144, 8
      %s146 = smul.addr %s145, 8
      %s147 = scalar_lea.vmem %s0, %s146
      %p148 = pneg %p35
      %p149 = pneg %p32
      %p150 = pneg %p56
      %p151 = pneg %p53
      %p152 = pneg %p77
      %p153 = pneg %p74
      %p154 = pneg %p103
      %p155 = pneg %p100
      %p156 = scmp.lt.s32.totalorder %s14, 1
      %s157 = scalar_select %p156, %s14, 1
      %s158 = smul.addr %s157, 8
      %s159 = smul.addr %s158, 8
      %s160 = scalar_lea.vmem %s3, %s159
      %p161 = scmp.lt.s32.totalorder %s14, 1
      %s162 = scalar_select %p161, %s14, 1
      %s163 = smul.addr %s162, 8
      %s164 = smul.addr %s163, 8
      %s165 = scalar_lea.vmem %s0, %s164
      %p166 = scmp.lt.s32.totalorder %s14, 1
      %s167 = scalar_select %p166, %s14, 1
      %s168 = smul.addr %s167, 8
      %s169 = smul.addr %s168, 8
      %s170 = scalar_lea.vmem %s3, %s169
      %v171 = vld [vmem:[%s165] sm:$0xff]
      %v172 = vld [vmem:[%s165 + $0x8] sm:$0xff]
      %v173 = vld [vmem:[%s165 + $0x10] sm:$0xff]
      %v174 = vld [vmem:[%s165 + $0x18] sm:$0xff]
      %v175 = vld [vmem:[%s165 + $0x20] sm:$0xff]
      %v176 = vld [vmem:[%s165 + $0x28] sm:$0xff]
      %v177 = vld [vmem:[%s165 + $0x30] sm:$0xff]
      %v178 = vld [vmem:[%s165 + $0x38] sm:$0xff]
      %v179 = vadd.f32 %v171, %v172
      %180 = vadd.xlane.f32.xlu0 %v179
      %v181 = vpop.xlane.xlu0 %180
      %v182 = vadd.f32 %v173, %v174
      %183 = vadd.xlane.f32.xlu0 %v182
      %v184 = vpop.xlane.xlu0 %183
      %v185 = vadd.f32 %v175, %v176
      %186 = vadd.xlane.f32.xlu0 %v185
      %v187 = vpop.xlane.xlu0 %186
      %v188 = vadd.f32 %v177, %v178
      %189 = vadd.xlane.f32.xlu0 %v188
      %v190 = vpop.xlane.xlu0 %189
      %v191 = vmul.f32 %v181, 0.00390625
      %v192 = vmul.f32 %v184, 0.00390625
      %v193 = vmul.f32 %v187, 0.00390625
      %v194 = vmul.f32 %v190, 0.00390625
      %v195 = vld [vmem:[%s1] sm:$0xff]
      %v196 = vld [vmem:[%s1 + $0x8] sm:$0xff]
      %v197 = vld [vmem:[%s1 + $0x10] sm:$0xff]
      %v198 = vld [vmem:[%s1 + $0x18] sm:$0xff]
      %v199 = vld [vmem:[%s1 + $0x20] sm:$0xff]
      %v200 = vld [vmem:[%s1 + $0x28] sm:$0xff]
      %v201 = vld [vmem:[%s1 + $0x30] sm:$0xff]
      %v202 = vld [vmem:[%s1 + $0x38] sm:$0xff]
      %v203 = vld [vmem:[%s1 + $0x40] sm:$0xff]
      %v204 = vld [vmem:[%s1 + $0x48] sm:$0xff]
      %v205 = vld [vmem:[%s1 + $0x50] sm:$0xff]
      %v206 = vld [vmem:[%s1 + $0x58] sm:$0xff]
      %v207 = vld [vmem:[%s1 + $0x60] sm:$0xff]
      %v208 = vld [vmem:[%s1 + $0x68] sm:$0xff]
      %v209 = vld [vmem:[%s1 + $0x70] sm:$0xff]
      %v210 = vld [vmem:[%s1 + $0x78] sm:$0xff]
      %vm211 = vcmask 261120
      %v213 = vsel %vm211, %v195, 0
      %v216 = vsel %vm211, %v196, 0
      %v219 = vsel %vm211, %v197, 0
      %v222 = vsel %vm211, %v198, 0
      %v225 = vsel %vm211, %v199, 0
      %v228 = vsel %vm211, %v200, 0
      %v231 = vsel %vm211, %v201, 0
      %v234 = vsel %vm211, %v202, 0
      %v237 = vsel %vm211, %v203, 0
      %v240 = vsel %vm211, %v204, 0
      %v243 = vsel %vm211, %v205, 0
      %v246 = vsel %vm211, %v206, 0
      %v249 = vsel %vm211, %v207, 0
      %v252 = vsel %vm211, %v208, 0
      %v255 = vsel %vm211, %v209, 0
      %v258 = vsel %vm211, %v210, 0
      %260 = vmatprep.subr.mxu0 0.0
      %261 = vmatpush1.msra.mxu0 %v191
      %262 = vmatprep.subr.mxu0 0.0
      %263 = vmatpush1.msra.mxu0 %v192
      %264 = vmatprep.subr.mxu0 0.0
      %265 = vmatpush1.msra.mxu0 %v193
      %266 = vmatprep.subr.mxu0 0.0
      %267 = vmatpush1.msra.mxu0 %v194
      %268 = vmatprep.subr.mxu0 0.0
      %269 = vmatpush1.msra.mxu0 0.0
      %270 = vmatprep.subr.mxu0 0.0
      %271 = vmatpush1.msra.mxu0 0.0
      %272 = vmatprep.subr.mxu0 0.0
      %273 = vmatpush1.msra.mxu0 0.0
      %274 = vmatprep.subr.mxu0 0.0
      %275 = vmatpush1.msra.mxu0 0.0
      %276 = vmatprep.subr.mxu0 0.0
      %277 = vmatpush1.msra.mxu0 0.0
      %278 = vmatprep.subr.mxu0 0.0
      %279 = vmatpush1.msra.mxu0 0.0
      %280 = vmatprep.subr.mxu0 0.0
      %281 = vmatpush1.msra.mxu0 0.0
      %282 = vmatprep.subr.mxu0 0.0
      %283 = vmatpush1.msra.mxu0 0.0
      %284 = vmatprep.subr.mxu0 0.0
      %285 = vmatpush1.msra.mxu0 0.0
      %286 = vmatprep.subr.mxu0 0.0
      %287 = vmatpush1.msra.mxu0 0.0
      %288 = vmatprep.subr.mxu0 0.0
      %289 = vmatpush1.msra.mxu0 0.0
      %290 = vmatprep.subr.mxu0 0.0
      %291 = vmatpush1.msra.mxu0 0.0
      %292 = vmatprep.subr.mxu0 0.0
      %293 = vmatpush1.msra.mxu0 0.0
      %294 = vmatprep.subr.mxu0 0.0
      %295 = vmatpush1.msra.mxu0 0.0
      %296 = vmatprep.subr.mxu0 0.0
      %297 = vmatpush1.msra.mxu0 0.0
      %298 = vmatprep.subr.mxu0 0.0
      %299 = vmatpush1.msra.mxu0 0.0
      %300 = vmatprep.subr.mxu0 0.0
      %301 = vmatpush1.msra.mxu0 0.0
      %302 = vmatprep.subr.mxu0 0.0
      %303 = vmatpush1.msra.mxu0 0.0
      %304 = vmatprep.subr.mxu0 0.0
      %305 = vmatpush1.msra.mxu0 0.0
      %306 = vmatprep.subr.mxu0 0.0
      %307 = vmatpush1.msra.mxu0 0.0
      %308 = vmatprep.subr.mxu0 0.0
      %309 = vmatpush1.msra.mxu0 0.0
      %310 = vmatprep.subr.mxu0 0.0
      %311 = vmatpush1.msra.mxu0 0.0
      %312 = vmatprep.subr.mxu0 0.0
      %313 = vmatpush1.msra.mxu0 0.0
      %314 = vmatprep.subr.mxu0 0.0
      %315 = vmatpush1.msra.mxu0 0.0
      %316 = vmatprep.subr.mxu0 0.0
      %317 = vmatpush1.msra.mxu0 0.0
      %318 = vmatprep.subr.mxu0 0.0
      %319 = vmatpush1.msra.mxu0 0.0
      %320 = vmatprep.subr.mxu0 0.0
      %321 = vmatpush1.msra.mxu0 0.0
      %322 = vmatprep.subr.mxu0 0.0
      %323 = vmatpush1.msra.mxu0 0.0
      %324 = vmatprep.mubr.f32.mxu0 0.0
      %325 = vmatmul.mubr.f32.gmra.mrb[0].mxu0 %v213
      %v326 = vpop.f32.mrb[0].mxu0
      %v327 = vadd.f32 0.0, %v326
      %v328 = vpop.f32.mrb[0].mxu0
      %329 = vmatprep.mubr.f32.mxu0 0.0
      %330 = vmatmul.mubr.f32.gmra.mrb[0].mxu0 %v216
      %v331 = vpop.f32.mrb[0].mxu0
      %v332 = vadd.f32 0.0, %v331
      %v333 = vpop.f32.mrb[0].mxu0
      %334 = vmatprep.mubr.f32.mxu0 0.0
      %335 = vmatmul.mubr.f32.gmra.mrb[0].mxu0 %v219
      %v336 = vpop.f32.mrb[0].mxu0
      %v337 = vadd.f32 0.0, %v336
      %v338 = vpop.f32.mrb[0].mxu0
      %339 = vmatprep.mubr.f32.mxu0 0.0
      %340 = vmatmul.mubr.f32.gmra.mrb[0].mxu0 %v222
      %v341 = vpop.f32.mrb[0].mxu0
      %v342 = vadd.f32 0.0, %v341
      %v343 = vpop.f32.mrb[0].mxu0
      %344 = vmatprep.mubr.f32.mxu0 0.0
      %345 = vmatmul.mubr.f32.gmra.mrb[0].mxu0 %v225
      %v346 = vpop.f32.mrb[0].mxu0
      %v347 = vadd.f32 0.0, %v346
      %v348 = vpop.f32.mrb[0].mxu0
      %349 = vmatprep.mubr.f32.mxu0 0.0
      %350 = vmatmul.mubr.f32.gmra.mrb[0].mxu0 %v228
      %v351 = vpop.f32.mrb[0].mxu0
      %v352 = vadd.f32 0.0, %v351
      %v353 = vpop.f32.mrb[0].mxu0
      %354 = vmatprep.mubr.f32.mxu0 0.0
      %355 = vmatmul.mubr.f32.gmra.mrb[0].mxu0 %v231
      %v356 = vpop.f32.mrb[0].mxu0
      %v357 = vadd.f32 0.0, %v356
      %v358 = vpop.f32.mrb[0].mxu0
      %359 = vmatprep.mubr.f32.mxu0 0.0
      %360 = vmatmul.mubr.f32.gmra.mrb[0].mxu0 %v234
      %v361 = vpop.f32.mrb[0].mxu0
      %v362 = vadd.f32 0.0, %v361
      %v363 = vpop.f32.mrb[0].mxu0
      %364 = vmatprep.mubr.f32.mxu0 0.0
      %365 = vmatmul.mubr.f32.gmra.mrb[0].mxu0 %v237
      %v366 = vpop.f32.mrb[0].mxu0
      %v367 = vadd.f32 0.0, %v366
      %v368 = vpop.f32.mrb[0].mxu0
      %369 = vmatprep.mubr.f32.mxu0 0.0
      %370 = vmatmul.mubr.f32.gmra.mrb[0].mxu0 %v240
      %v371 = vpop.f32.mrb[0].mxu0
      %v372 = vadd.f32 0.0, %v371
      %v373 = vpop.f32.mrb[0].mxu0
      %374 = vmatprep.mubr.f32.mxu0 0.0
      %375 = vmatmul.mubr.f32.gmra.mrb[0].mxu0 %v243
      %v376 = vpop.f32.mrb[0].mxu0
      %v377 = vadd.f32 0.0, %v376
      %v378 = vpop.f32.mrb[0].mxu0
      %379 = vmatprep.mubr.f32.mxu0 0.0
      %380 = vmatmul.mubr.f32.gmra.mrb[0].mxu0 %v246
      %v381 = vpop.f32.mrb[0].mxu0
      %v382 = vadd.f32 0.0, %v381
      %v383 = vpop.f32.mrb[0].mxu0
      %384 = vmatprep.mubr.f32.mxu0 0.0
      %385 = vmatmul.mubr.f32.gmra.mrb[0].mxu0 %v249
      %v386 = vpop.f32.mrb[0].mxu0
      %v387 = vadd.f32 0.0, %v386
      %v388 = vpop.f32.mrb[0].mxu0
      %389 = vmatprep.mubr.f32.mxu0 0.0
      %390 = vmatmul.mubr.f32.gmra.mrb[0].mxu0 %v252
      %v391 = vpop.f32.mrb[0].mxu0
      %v392 = vadd.f32 0.0, %v391
      %v393 = vpop.f32.mrb[0].mxu0
      %394 = vmatprep.mubr.f32.mxu0 0.0
      %395 = vmatmul.mubr.f32.gmra.mrb[0].mxu0 %v255
      %v396 = vpop.f32.mrb[0].mxu0
      %v397 = vadd.f32 0.0, %v396
      %v398 = vpop.f32.mrb[0].mxu0
      %399 = vmatprep.mubr.f32.mxu0 0.0
      %400 = vmatmul.mubr.f32.gmra.mrb[0].mxu0 %v258
      %v401 = vpop.f32.mrb[0].mxu0
      %v402 = vadd.f32 0.0, %v401
      %v403 = vpop.f32.mrb[0].mxu0
      %404 = vdwg.mxu0
      %v405 = vmax.f32 %v327, 0.0
      %v406 = vmax.f32 %v332, 0.0
      %v407 = vmax.f32 %v337, 0.0
      %v408 = vmax.f32 %v342, 0.0
      %v409 = vmax.f32 %v347, 0.0
      %v410 = vmax.f32 %v352, 0.0
      %v411 = vmax.f32 %v357, 0.0
      %v412 = vmax.f32 %v362, 0.0
      %v413 = vmax.f32 %v367, 0.0
      %v414 = vmax.f32 %v372, 0.0
      %v415 = vmax.f32 %v377, 0.0
      %v416 = vmax.f32 %v382, 0.0
      %v417 = vmax.f32 %v387, 0.0
      %v418 = vmax.f32 %v392, 0.0
      %v419 = vmax.f32 %v397, 0.0
      %v420 = vmax.f32 %v402, 0.0
      %v421 = vld [vmem:[%s2] sm:$0xff]
      %v422 = vld [vmem:[%s2 + $0x8] sm:$0xff]
      %v423 = vld [vmem:[%s2 + $0x10] sm:$0xff]
      %v424 = vld [vmem:[%s2 + $0x18] sm:$0xff]
      %425 = vmatprep.subr.mxu0 0.0
      %426 = vmatpush1.msra.mxu0 %v405
      %427 = vmatprep.subr.mxu0 0.0
      %428 = vmatpush1.msra.mxu0 %v406
      %429 = vmatprep.subr.mxu0 0.0
      %430 = vmatpush1.msra.mxu0 %v407
      %431 = vmatprep.subr.mxu0 0.0
      %432 = vmatpush1.msra.mxu0 %v408
      %433 = vmatprep.subr.mxu0 0.0
      %434 = vmatpush1.msra.mxu0 %v409
      %435 = vmatprep.subr.mxu0 0.0
      %436 = vmatpush1.msra.mxu0 %v410
      %437 = vmatprep.subr.mxu0 0.0
      %438 = vmatpush1.msra.mxu0 %v411
      %439 = vmatprep.subr.mxu0 0.0
      %440 = vmatpush1.msra.mxu0 %v412
      %441 = vmatprep.subr.mxu0 0.0
      %442 = vmatpush1.msra.mxu0 %v413
      %443 = vmatprep.subr.mxu0 0.0
      %444 = vmatpush1.msra.mxu0 %v414
      %445 = vmatprep.subr.mxu0 0.0
      %446 = vmatpush1.msra.mxu0 %v415
      %447 = vmatprep.subr.mxu0 0.0
      %448 = vmatpush1.msra.mxu0 %v416
      %449 = vmatprep.subr.mxu0 0.0
      %450 = vmatpush1.msra.mxu0 %v417
      %451 = vmatprep.subr.mxu0 0.0
      %452 = vmatpush1.msra.mxu0 %v418
      %453 = vmatprep.subr.mxu0 0.0
      %454 = vmatpush1.msra.mxu0 %v419
      %455 = vmatprep.subr.mxu0 0.0
      %456 = vmatpush1.msra.mxu0 %v420
      %457 = vmatprep.subr.mxu0 0.0
      %458 = vmatpush1.msra.mxu0 0.0
      %459 = vmatprep.subr.mxu0 0.0
      %460 = vmatpush1.msra.mxu0 0.0
      %461 = vmatprep.subr.mxu0 0.0
      %462 = vmatpush1.msra.mxu0 0.0
      %463 = vmatprep.subr.mxu0 0.0
      %464 = vmatpush1.msra.mxu0 0.0
      %465 = vmatprep.subr.mxu0 0.0
      %466 = vmatpush1.msra.mxu0 0.0
      %467 = vmatprep.subr.mxu0 0.0
      %468 = vmatpush1.msra.mxu0 0.0
      %469 = vmatprep.subr.mxu0 0.0
      %470 = vmatpush1.msra.mxu0 0.0
      %471 = vmatprep.subr.mxu0 0.0
      %472 = vmatpush1.msra.mxu0 0.0
      %473 = vmatprep.subr.mxu0 0.0
      %474 = vmatpush1.msra.mxu0 0.0
      %475 = vmatprep.subr.mxu0 0.0
      %476 = vmatpush1.msra.mxu0 0.0
      %477 = vmatprep.subr.mxu0 0.0
      %478 = vmatpush1.msra.mxu0 0.0
      %479 = vmatprep.subr.mxu0 0.0
      %480 = vmatpush1.msra.mxu0 0.0
      %481 = vmatprep.subr.mxu0 0.0
      %482 = vmatpush1.msra.mxu0 0.0
      %483 = vmatprep.subr.mxu0 0.0
      %484 = vmatpush1.msra.mxu0 0.0
      %485 = vmatprep.subr.mxu0 0.0
      %486 = vmatpush1.msra.mxu0 0.0
      %487 = vmatprep.subr.mxu0 0.0
      %488 = vmatpush1.msra.mxu0 0.0
      %489 = vmatprep.mubr.f32.mxu0 0.0
      %490 = vmatmul.mubr.f32.gmra.mrb[0].mxu0 %v421
      %v491 = vpop.f32.mrb[0].mxu0
      %v492 = vadd.f32 0.0, %v491
      %v493 = vpop.f32.mrb[0].mxu0
      %494 = vmatprep.mubr.f32.mxu0 0.0
      %495 = vmatmul.mubr.f32.gmra.mrb[0].mxu0 %v422
      %v496 = vpop.f32.mrb[0].mxu0
      %v497 = vadd.f32 0.0, %v496
      %v498 = vpop.f32.mrb[0].mxu0
      %499 = vmatprep.mubr.f32.mxu0 0.0
      %500 = vmatmul.mubr.f32.gmra.mrb[0].mxu0 %v423
      %v501 = vpop.f32.mrb[0].mxu0
      %v502 = vadd.f32 0.0, %v501
      %v503 = vpop.f32.mrb[0].mxu0
      %504 = vmatprep.mubr.f32.mxu0 0.0
      %505 = vmatmul.mubr.f32.gmra.mrb[0].mxu0 %v424
      %v506 = vpop.f32.mrb[0].mxu0
      %v507 = vadd.f32 0.0, %v506
      %v508 = vpop.f32.mrb[0].mxu0
      %509 = vdwg.mxu0
      %v510 = vsub.f32 0.0, %v492
      %v511 = vsub.f32 0.0, %v497
      %v512 = vsub.f32 0.0, %v502
      %v513 = vsub.f32 0.0, %v507
      %v514 = vmul.f32 %v510, 1.442695
      %v515 = vpow.pop %v514
      %v516 = vmul.f32 %v511, 1.442695
      %v517 = vpow.pop %v516
      %v518 = vmul.f32 %v512, 1.442695
      %v519 = vpow.pop %v518
      %v520 = vmul.f32 %v513, 1.442695
      %v521 = vpow.pop %v520
      %v522 = vadd.f32 %v515, 1.0
      %v523 = vadd.f32 %v517, 1.0
      %v524 = vadd.f32 %v519, 1.0
      %v525 = vadd.f32 %v521, 1.0
      %v526 = vrcp.pop %v522
      %v527 = vmul.f32 1.0, %v526
      %v528 = vrcp.pop %v523
      %v529 = vmul.f32 1.0, %v528
      %v530 = vrcp.pop %v524
      %v531 = vmul.f32 1.0, %v530
      %v532 = vrcp.pop %v525
      %v533 = vmul.f32 1.0, %v532
      %535 = vset.pattern.permute.xlu0 0
      %536 = vperm.xlu0 %535, %v527
      %v537 = vpop.permute.xlu0 %536
      %540 = vset.pattern.permute.xlu0 0
      %541 = vperm.xlu0 %540, %v529
      %v542 = vpop.permute.xlu0 %541
      %545 = vset.pattern.permute.xlu0 0
      %546 = vperm.xlu0 %545, %v531
      %v547 = vpop.permute.xlu0 %546
      %550 = vset.pattern.permute.xlu0 0
      %551 = vperm.xlu0 %550, %v533
      %v552 = vpop.permute.xlu0 %551
      %v554 = vmul.f32 %v171, %v537
      %v555 = vmul.f32 %v172, %v537
      %v556 = vmul.f32 %v173, %v542
      %v557 = vmul.f32 %v174, %v542
      %v558 = vmul.f32 %v175, %v547
      %v559 = vmul.f32 %v176, %v547
      %v560 = vmul.f32 %v177, %v552
      %v561 = vmul.f32 %v178, %v552
      %562 = vst [vmem:[%s170] sm:$0xff] %v554
      %563 = vst [vmem:[%s170 + $0x8] sm:$0xff] %v555
      %564 = vst [vmem:[%s170 + $0x10] sm:$0xff] %v556
      %565 = vst [vmem:[%s170 + $0x18] sm:$0xff] %v557
      %566 = vst [vmem:[%s170 + $0x20] sm:$0xff] %v558
      %567 = vst [vmem:[%s170 + $0x28] sm:$0xff] %v559
      %568 = vst [vmem:[%s170 + $0x30] sm:$0xff] %v560
      %569 = vst [vmem:[%s170 + $0x38] sm:$0xff] %v561
      %p570 = scmp.lt.s32.totalorder %s14, 1
      %s571 = scalar_select %p570, %s14, 1
      %s572 = smul.addr %s571, 8
      %s573 = smul.addr %s572, 8
      %s574 = scalar_lea.vmem %s3, %s573
      // Predicated region
      $region33: #{se_forward.1} parent=31 // pred_check
        %p575 = pneg %p100
      $region34: #{se_forward.1} parent=31 // pred_check_branch
        %577 = sbr.rel (%p575) target = $region36
      $region35: #{se_forward.1} parent=31 // pred_region
        _
      $region36: #{se_forward.1} parent=31 // pred_fallthru
        _
    $region32: #{se_forward.1} parent=5 // pred_fallthru
      _
    %p578 = scmp.le.s32.totalorder 2, %s9
    // Predicated region
    $region37: #{se_forward.1} parent=5 // pred_check
      %p579 = pneg %p578
    $region38: #{se_forward.1} parent=5 // pred_check_branch
      %581 = sbr.rel (%p579) target = $region40
    $region39: #{se_forward.1} parent=5 // pred_region
      %s582 = ssub.s32 %s9, 2
      // Predicated region
      $region41: #{se_forward.1} parent=39 // pred_check
        %p583 = pneg %p106
      $region42: #{se_forward.1} parent=39 // pred_check_branch
        %585 = sbr.rel (%p583) target = $region44
      $region43: #{se_forward.1} parent=39 // pred_region
        %p586 = scmp.lt.s32.totalorder %s15, 1
        %s587 = scalar_select %p586, %s15, 1
        %s588 = smul.addr %s587, 8
        %s589 = smul.addr %s588, 8
        %s590 = scalar_lea.vmem %s3, %s589
      $region44: #{se_forward.1} parent=39 // pred_fallthru
        _
    $region40: #{se_forward.1} parent=5 // pred_fallthru
      _
  $region6: #{se_forward.1} parent=0 // loop_footer
    %s13 = sadd.s32 1, %s9
  $region7: #{se_forward.1} parent=0 // loop_footer_branch
    %8 = sbr.rel target = $region3
  $region8: #{se_forward.1} parent=0 // loop_exit
    _

</llo_original>
